<compile_context>
chip_gen: v6e
topology: v6e:2x2x1
jax: 0.10.0
libtpu: 0.0.40
codegen_flags: <defaults>
</compile_context>

<pallas_src>
import functools

import jax
import jax.numpy as jnp
from jax.experimental import pallas as pl
from jax.experimental.pallas import tpu as pltpu


def _dice_sums_kernel(x_ref, t_ref, out_ref, i_acc, p_acc, tt_acc, *,
                      tile_extent, total_extent, kp, normalization,
                      has_ragged, assume_binary_target):
    """Accumulates per-channel [intersect, sum(p^2), sum(t^2)] for one (n, p)."""
    p_idx = pl.program_id(1)
    k = pl.program_id(2)

    @pl.when(k == 0)
    def _():
        i_acc[...] = jnp.zeros_like(i_acc)
        p_acc[...] = jnp.zeros_like(p_acc)
        tt_acc[...] = jnp.zeros_like(tt_acc)

    g = p_idx * kp + k                         # global tile index (runtime scalar)
    full_tiles = total_extent // tile_extent   # static: tiles fully in-bounds

    def reduce_c1(v):
        # Reduce everything except the channel axis -> (C, 1).
        while v.ndim > 2:
            v = jnp.sum(v, axis=-1)
        return jnp.sum(v, axis=1, keepdims=True)

    def accumulate(masked):
        x = x_ref[0].astype(jnp.float32)       # (C, T) or (C, T, 128)
        t = t_ref[0].astype(jnp.float32)
        if normalization == "sigmoid":
            p = jax.nn.sigmoid(x)
        else:
            # Softmax over channels (axis 0 == dim=1 of NCHW).  One reciprocal
            # on the normalizer row + C multiplies instead of C full divides.
            m = jnp.max(x, axis=0, keepdims=True)
            e = jnp.exp(x - m)
            inv = 1.0 / jnp.sum(e, axis=0, keepdims=True)
            p = e * inv
        if masked:
            # Only emitted for tiles overhanging the array (partial / padded
            # grid blocks): zero out logical positions past the true extent.
            idx = (jax.lax.broadcasted_iota(jnp.int32, p.shape, 1)
                   + g * tile_extent)
            valid = idx < total_extent
            p = jnp.where(valid, p, 0.0)
            t = jnp.where(valid, t, 0.0)
        i_acc[...] += reduce_c1(p * t)
        p_acc[...] += reduce_c1(p * p)
        tt_acc[...] += reduce_c1(t if assume_binary_target else t * t)

    if has_ragged:
        @pl.when(g < full_tiles)
        def _():
            accumulate(False)          # fast path: no mask cost

        @pl.when(g >= full_tiles)
        def _():
            accumulate(True)           # last / padded tiles only
    else:
        accumulate(False)

    # Narrow (C, 3) store only once per (n, p), after the last tile.
    @pl.when(k == kp - 1)
    def _():
        out_ref[0, 0] = jnp.concatenate(
            [i_acc[...], p_acc[...], tt_acc[...]], axis=1)


def abstract_dice_loss(inp, tgt, weight=None, sigmoid_normalization=True,
                       epsilon=1e-6, tile_elems=None, assume_binary_target=False):
    """Forward of _AbstractDiceLoss with the standard per-channel dice."""
    assert inp.shape == tgt.shape
    N, C = int(inp.shape[0]), int(inp.shape[1])
    hw = 1
    for d in inp.shape[2:]:
        hw *= int(d)

    norm = "sigmoid" if sigmoid_normalization else "softmax"

    # --- generation-aware VMEM budget -------------------------------------
    try:
        vmem_cap = int(pltpu.get_tpu_info().vmem_capacity_bytes)
    except Exception:
        vmem_cap = 64 << 20       # conservative default (fits every generation)
    vmem_budget = max(16 << 20, min(int(0.70 * vmem_cap), 96 << 20))

    # Per-element VMEM cost: double-buffered input streams + headroom for the
    # f32 full-block intermediates Mosaic materializes (softmax needs more).
    xb, tb = inp.dtype.itemsize, tgt.dtype.itemsize
    interm_f32 = 4 if norm == "sigmoid" else 6
    bytes_per_elem = 2 * (xb + tb) + 4 * interm_f32
    if tile_elems is None:
        tile_elems = max(128, (vmem_budget // bytes_per_elem) // max(C, 1))
    tile_elems = int(tile_elems)

    # --- layout: sublane-packed view when possible -------------------------
    packed = (hw % 128 == 0) and (hw >= 128)
    if packed:
        R = hw // 128
        x_r = inp.reshape(N, C, R, 128)        # free, contiguous
        t_r = tgt.reshape(N, C, R, 128)        # no dtype cast (no extra HBM pass)
        rows_budget = max(8, ((tile_elems // 128) // 8) * 8)
        rows_tile = R if R <= rows_budget else rows_budget
        tile_extent, total_extent = rows_tile, R
        K = pl.cdiv(R, rows_tile)
        in_block = (1, C, rows_tile, 128)
    else:
        x_r = inp.reshape(N, C, hw)
        t_r = tgt.reshape(N, C, hw)
        cols_budget = max(128, (tile_elems // 128) * 128)
        tile_hw = hw if hw <= cols_budget else cols_budget
        tile_extent, total_extent = tile_hw, hw
        K = pl.cdiv(hw, tile_hw)
        in_block = (1, C, tile_hw)

    # --- megacore split of the reduction axis when the batch can't feed it --
    P = 2 if (N == 1 and K >= 2) else 1
    Kp = pl.cdiv(K, P)
    has_ragged = (total_extent % tile_extent != 0) or (P * Kp != K)

    def in_index(n, p, k):
        # Clamp over-hanging global tile indices to the last real block; the
        # kernel masks their contribution to zero, so the DMA stays in-bounds.
        g = jnp.minimum(p * Kp + k, K - 1)
        if packed:
            return (n, 0, g, 0)
        return (n, 0, g)

    kernel = functools.partial(
        _dice_sums_kernel, tile_extent=tile_extent, total_extent=total_extent,
        kp=Kp, normalization=norm, has_ragged=has_ragged,
        assume_binary_target=assume_binary_target)

    partials = pl.pallas_call(
        kernel,
        out_shape=jax.ShapeDtypeStruct((N, P, C, 3), jnp.float32),
        grid_spec=pltpu.PrefetchScalarGridSpec(
            num_scalar_prefetch=0,
            grid=(N, P, Kp),
            in_specs=[
                pl.BlockSpec(in_block, in_index),
                pl.BlockSpec(in_block, in_index),
            ],
            out_specs=pl.BlockSpec((1, 1, C, 3), lambda n, p, k: (n, p, 0, 0)),
            scratch_shapes=[pltpu.VMEM((C, 1), jnp.float32)] * 3,
        ),
        compiler_params=pltpu.CompilerParams(
            dimension_semantics=("parallel", "parallel", "arbitrary"),
            vmem_limit_bytes=int(vmem_budget)),
    )(x_r, t_r)

    sums = jnp.sum(partials, axis=(0, 1))      # (C, 3): reduce partials
    intersect = sums[:, 0]
    if weight is not None:   # self.weight buffer (None by default in __init__)
        intersect = weight.astype(jnp.float32) * intersect
    denominator = jnp.clip(sums[:, 1] + sums[:, 2], epsilon, None)
    per_channel_dice = 2.0 * intersect / denominator
    return 1.0 - jnp.mean(per_channel_dice)


def _reference_loss(inp, tgt, weight=None, sigmoid_normalization=True, epsilon=1e-6):
    C = inp.shape[1]
    if sigmoid_normalization:
        p = jax.nn.sigmoid(inp.astype(jnp.float32))
    else:
        p = jax.nn.softmax(inp.astype(jnp.float32), axis=1)
    p = jnp.moveaxis(p, 1, 0).reshape(C, -1)
    t = jnp.moveaxis(tgt, 1, 0).reshape(C, -1).astype(jnp.float32)
    intersect = jnp.sum(p * t, axis=1)
    if weight is not None:
        intersect = weight * intersect
    denom = jnp.clip(jnp.sum(p * p, axis=1) + jnp.sum(t * t, axis=1), epsilon, None)
    return 1.0 - jnp.mean(2.0 * intersect / denom)


if __name__ == "__main__":
    key = jax.random.PRNGKey(0)
    keys = jax.random.split(key, 6)

    # TODO(synk): _AbstractDiceLoss.dice is abstract (raises NotImplementedError);
    # we instantiate it with the standard per-channel dice used by DiceLoss.
    N, C, H, W = 2, 4, 16, 16
    x = jax.random.normal(keys[0], (N, C, H, W), dtype=jnp.float32)        # logits
    target = (jax.random.uniform(keys[1], (N, C, H, W)) > 0.5).astype(jnp.float32)

    # Sigmoid-normalized path (default); packed (sublane-dense) layout.
    loss = abstract_dice_loss(x, target, weight=None, sigmoid_normalization=True)
    loss = jax.block_until_ready(loss)
    ref = _reference_loss(x, target, weight=None, sigmoid_normalization=True)
    assert jnp.allclose(loss, ref, rtol=1e-5, atol=1e-5), (loss, ref)

    # Softmax-normalized path.
    loss_sm = abstract_dice_loss(x, target, weight=None, sigmoid_normalization=False)
    loss_sm = jax.block_until_ready(loss_sm)
    ref_sm = _reference_loss(x, target, weight=None, sigmoid_normalization=False)
    assert jnp.allclose(loss_sm, ref_sm, rtol=1e-5, atol=1e-5), (loss_sm, ref_sm)

    # Flat fallback path with a ragged (masked, gated) tail: hw = 272.
    x2 = jax.random.normal(keys[2], (2, 4, 16, 17), dtype=jnp.float32)
    t2 = (jax.random.uniform(keys[3], (2, 4, 16, 17)) > 0.5).astype(jnp.float32)
    loss2 = abstract_dice_loss(x2, t2, sigmoid_normalization=True, tile_elems=128)
    loss2 = jax.block_until_ready(loss2)
    ref2 = _reference_loss(x2, t2, sigmoid_normalization=True)
    assert jnp.allclose(loss2, ref2, rtol=1e-5, atol=1e-5), (loss2, ref2)

    # N=1: packed layout, reduction axis split across P=2 (megacore path),
    # with a ragged rows tail and a fully-padded grid block (clamped index_map).
    x3 = jax.random.normal(keys[4], (1, 2, 20, 128), dtype=jnp.float32)
    t3 = (jax.random.uniform(keys[5], (1, 2, 20, 128)) > 0.5).astype(jnp.float32)
    loss3 = abstract_dice_loss(x3, t3, sigmoid_normalization=False, tile_elems=1024)
    loss3 = jax.block_until_ready(loss3)
    ref3 = _reference_loss(x3, t3, sigmoid_normalization=False)
    assert jnp.allclose(loss3, ref3, rtol=1e-5, atol=1e-5), (loss3, ref3)

    print("KERNEL_OK")
</pallas_src>

<mosaic_0001>
module attributes {stable_mosaic.version = 11 : i64} {
  func.func @_dice_sums_kernel(%arg0: i32, %arg1: i32, %arg2: i32, %arg3: memref<1x4x2x128xf32, #tpu.memory_space<vmem>>, %arg4: memref<1x4x2x128xf32, #tpu.memory_space<vmem>>, %arg5: memref<1x1x4x3xf32, #tpu.memory_space<vmem>>, %arg6: memref<4x1xf32, #tpu.memory_space<vmem>>, %arg7: memref<4x1xf32, #tpu.memory_space<vmem>>, %arg8: memref<4x1xf32, #tpu.memory_space<vmem>>) attributes {dimension_semantics = [#tpu.dimension_semantics<parallel>, #tpu.dimension_semantics<parallel>, #tpu.dimension_semantics<arbitrary>], iteration_bounds = array<i64: 2, 1, 1>, scalar_prefetch = 0 : i64, scratch_operands = 3 : i64, tpu.core_type = #tpu.core_type<tc>, window_params = [{transform_indices = @transform_0, window_bounds = array<i64: 1, 4, 2, 128>}, {transform_indices = @transform_1, window_bounds = array<i64: 1, 4, 2, 128>}, {transform_indices = @transform_2, window_bounds = array<i64: 1, 1, 4, 3>}]} {
    %c0_i32 = arith.constant 0 : i32
    %0 = arith.cmpi eq, %arg2, %c0_i32 : i32
    %1 = arith.extui %0 : i1 to i32
    %c0_i32_0 = arith.constant 0 : i32
    %2 = arith.cmpi ne, %1, %c0_i32_0 : i32
    scf.if %2 {
      %cst_28 = arith.constant 0.000000e+00 : f32
      %36 = vector.broadcast %cst_28 : f32 to vector<4x1xf32>
      %c0_29 = arith.constant 0 : index
      %c0_30 = arith.constant 0 : index
      %37 = vector.load %arg6[%c0_29, %c0_30] : memref<4x1xf32, #tpu.memory_space<vmem>>, vector<4x1xf32>
      tpu.vector_store %arg6[%c0_29, %c0_30], %36 {strides = array<i32>} : memref<4x1xf32, #tpu.memory_space<vmem>>, vector<4x1xf32>,
      %cst_31 = arith.constant 0.000000e+00 : f32
      %38 = vector.broadcast %cst_31 : f32 to vector<4x1xf32>
      %c0_32 = arith.constant 0 : index
      %c0_33 = arith.constant 0 : index
      %39 = vector.load %arg7[%c0_32, %c0_33] : memref<4x1xf32, #tpu.memory_space<vmem>>, vector<4x1xf32>
      tpu.vector_store %arg7[%c0_32, %c0_33], %38 {strides = array<i32>} : memref<4x1xf32, #tpu.memory_space<vmem>>, vector<4x1xf32>,
      %cst_34 = arith.constant 0.000000e+00 : f32
      %40 = vector.broadcast %cst_34 : f32 to vector<4x1xf32>
      %c0_35 = arith.constant 0 : index
      %c0_36 = arith.constant 0 : index
      %41 = vector.load %arg8[%c0_35, %c0_36] : memref<4x1xf32, #tpu.memory_space<vmem>>, vector<4x1xf32>
      tpu.vector_store %arg8[%c0_35, %c0_36], %40 {strides = array<i32>} : memref<4x1xf32, #tpu.memory_space<vmem>>, vector<4x1xf32>,
    } else {
    }
    %c0 = arith.constant 0 : index
    %c0_1 = arith.constant 0 : index
    %c0_2 = arith.constant 0 : index
    %c0_3 = arith.constant 0 : index
    %3 = vector.load %arg3[%c0, %c0_1, %c0_2, %c0_3] : memref<1x4x2x128xf32, #tpu.memory_space<vmem>>, vector<1x4x2x128xf32>
    %4 = vector.shape_cast %3 : vector<1x4x2x128xf32> to vector<4x2x128xf32>
    %c0_4 = arith.constant 0 : index
    %c0_5 = arith.constant 0 : index
    %c0_6 = arith.constant 0 : index
    %c0_7 = arith.constant 0 : index
    %5 = vector.load %arg4[%c0_4, %c0_5, %c0_6, %c0_7] : memref<1x4x2x128xf32, #tpu.memory_space<vmem>>, vector<1x4x2x128xf32>
    %6 = vector.shape_cast %5 : vector<1x4x2x128xf32> to vector<4x2x128xf32>
    %7 = arith.negf %4 : vector<4x2x128xf32>
    %8 = math.exp %7 : vector<4x2x128xf32>
    %cst = arith.constant 1.000000e+00 : f32
    %9 = vector.broadcast %cst : f32 to vector<4x2x128xf32>
    %10 = arith.addf %9, %8 : vector<4x2x128xf32>
    %11 = arith.divf %9, %10 : vector<4x2x128xf32>
    %c0_8 = arith.constant 0 : index
    %c0_9 = arith.constant 0 : index
    %12 = vector.load %arg6[%c0_8, %c0_9] : memref<4x1xf32, #tpu.memory_space<vmem>>, vector<4x1xf32>
    %13 = arith.mulf %11, %6 : vector<4x2x128xf32>
    %cst_10 = arith.constant dense<0.000000e+00> : vector<4x2xf32>
    %14 = vector.multi_reduction <add>, %13, %cst_10 [2] : vector<4x2x128xf32> to vector<4x2xf32>
    %cst_11 = arith.constant dense<0.000000e+00> : vector<4xf32>
    %15 = vector.multi_reduction <add>, %14, %cst_11 [1] : vector<4x2xf32> to vector<4xf32>
    %16 = vector.shape_cast %15 : vector<4xf32> to vector<4x1xf32>
    %17 = arith.addf %12, %16 : vector<4x1xf32>
    %c0_12 = arith.constant 0 : index
    %c0_13 = arith.constant 0 : index
    %18 = vector.load %arg6[%c0_12, %c0_13] : memref<4x1xf32, #tpu.memory_space<vmem>>, vector<4x1xf32>
    tpu.vector_store %arg6[%c0_12, %c0_13], %17 {strides = array<i32>} : memref<4x1xf32, #tpu.memory_space<vmem>>, vector<4x1xf32>,
    %c0_14 = arith.constant 0 : index
    %c0_15 = arith.constant 0 : index
    %19 = vector.load %arg7[%c0_14, %c0_15] : memref<4x1xf32, #tpu.memory_space<vmem>>, vector<4x1xf32>
    %20 = arith.mulf %11, %11 : vector<4x2x128xf32>
    %cst_16 = arith.constant dense<0.000000e+00> : vector<4x2xf32>
    %21 = vector.multi_reduction <add>, %20, %cst_16 [2] : vector<4x2x128xf32> to vector<4x2xf32>
    %cst_17 = arith.constant dense<0.000000e+00> : vector<4xf32>
    %22 = vector.multi_reduction <add>, %21, %cst_17 [1] : vector<4x2xf32> to vector<4xf32>
    %23 = vector.shape_cast %22 : vector<4xf32> to vector<4x1xf32>
    %24 = arith.addf %19, %23 : vector<4x1xf32>
    %c0_18 = arith.constant 0 : index
    %c0_19 = arith.constant 0 : index
    %25 = vector.load %arg7[%c0_18, %c0_19] : memref<4x1xf32, #tpu.memory_space<vmem>>, vector<4x1xf32>
    tpu.vector_store %arg7[%c0_18, %c0_19], %24 {strides = array<i32>} : memref<4x1xf32, #tpu.memory_space<vmem>>, vector<4x1xf32>,
    %c0_20 = arith.constant 0 : index
    %c0_21 = arith.constant 0 : index
    %26 = vector.load %arg8[%c0_20, %c0_21] : memref<4x1xf32, #tpu.memory_space<vmem>>, vector<4x1xf32>
    %27 = arith.mulf %6, %6 : vector<4x2x128xf32>
    %cst_22 = arith.constant dense<0.000000e+00> : vector<4x2xf32>
    %28 = vector.multi_reduction <add>, %27, %cst_22 [2] : vector<4x2x128xf32> to vector<4x2xf32>
    %cst_23 = arith.constant dense<0.000000e+00> : vector<4xf32>
    %29 = vector.multi_reduction <add>, %28, %cst_23 [1] : vector<4x2xf32> to vector<4xf32>
    %30 = vector.shape_cast %29 : vector<4xf32> to vector<4x1xf32>
    %31 = arith.addf %26, %30 : vector<4x1xf32>
    %c0_24 = arith.constant 0 : index
    %c0_25 = arith.constant 0 : index
    %32 = vector.load %arg8[%c0_24, %c0_25] : memref<4x1xf32, #tpu.memory_space<vmem>>, vector<4x1xf32>
    tpu.vector_store %arg8[%c0_24, %c0_25], %31 {strides = array<i32>} : memref<4x1xf32, #tpu.memory_space<vmem>>, vector<4x1xf32>,
    %c0_i32_26 = arith.constant 0 : i32
    %33 = arith.cmpi eq, %arg2, %c0_i32_26 : i32
    %34 = arith.extui %33 : i1 to i32
    %c0_i32_27 = arith.constant 0 : i32
    %35 = arith.cmpi ne, %34, %c0_i32_27 : i32
    scf.if %35 {
      %c0_28 = arith.constant 0 : index
      %c0_29 = arith.constant 0 : index
      %36 = vector.load %arg6[%c0_28, %c0_29] : memref<4x1xf32, #tpu.memory_space<vmem>>, vector<4x1xf32>
      %c0_30 = arith.constant 0 : index
      %c0_31 = arith.constant 0 : index
      %37 = vector.load %arg7[%c0_30, %c0_31] : memref<4x1xf32, #tpu.memory_space<vmem>>, vector<4x1xf32>
      %c0_32 = arith.constant 0 : index
      %c0_33 = arith.constant 0 : index
      %38 = vector.load %arg8[%c0_32, %c0_33] : memref<4x1xf32, #tpu.memory_space<vmem>>, vector<4x1xf32>
      %39 = tpu.concatenate %36, %37, %38 in 1 : vector<4x1xf32>, vector<4x1xf32>, vector<4x1xf32> -> vector<4x3xf32>
      %c0_34 = arith.constant 0 : index
      %c0_35 = arith.constant 0 : index
      %c0_36 = arith.constant 0 : index
      %c0_37 = arith.constant 0 : index
      %40 = vector.load %arg5[%c0_34, %c0_35, %c0_36, %c0_37] : memref<1x1x4x3xf32, #tpu.memory_space<vmem>>, vector<1x1x4x3xf32>
      %41 = vector.shape_cast %40 : vector<1x1x4x3xf32> to vector<4x3xf32>
      %42 = vector.shape_cast %39 : vector<4x3xf32> to vector<1x1x4x3xf32>
      tpu.vector_store %arg5[%c0_34, %c0_35, %c0_36, %c0_37], %42 {strides = array<i32>} : memref<1x1x4x3xf32, #tpu.memory_space<vmem>>, vector<1x1x4x3xf32>,
    } else {
    }
    return
  }
  func.func @transform_0(%arg0: i32, %arg1: i32, %arg2: i32) -> (i32, i32, i32, i32) {
    %c1_i32 = arith.constant 1 : i32
    %0 = arith.muli %arg1, %c1_i32 : i32
    %1 = arith.addi %0, %arg2 : i32
    %c0_i32 = arith.constant 0 : i32
    %2 = arith.minsi %1, %c0_i32 : i32
    %c0_i32_0 = arith.constant 0 : i32
    %c0_i32_1 = arith.constant 0 : i32
    %c0_i32_2 = arith.constant 0 : i32
    return %arg0, %c0_i32_0, %2, %c0_i32_1 : i32, i32, i32, i32
  }
  func.func @transform_1(%arg0: i32, %arg1: i32, %arg2: i32) -> (i32, i32, i32, i32) {
    %c1_i32 = arith.constant 1 : i32
    %0 = arith.muli %arg1, %c1_i32 : i32
    %1 = arith.addi %0, %arg2 : i32
    %c0_i32 = arith.constant 0 : i32
    %2 = arith.minsi %1, %c0_i32 : i32
    %c0_i32_0 = arith.constant 0 : i32
    %c0_i32_1 = arith.constant 0 : i32
    %c0_i32_2 = arith.constant 0 : i32
    return %arg0, %c0_i32_0, %2, %c0_i32_1 : i32, i32, i32, i32
  }
  func.func @transform_2(%arg0: i32, %arg1: i32, %arg2: i32) -> (i32, i32, i32, i32) {
    %c0_i32 = arith.constant 0 : i32
    %c0_i32_0 = arith.constant 0 : i32
    %c0_i32_1 = arith.constant 0 : i32
    return %arg0, %arg1, %c0_i32, %c0_i32_0 : i32, i32, i32, i32
  }
}

</mosaic_0001>

<llo_original>
// kernel: tpu_custom_call.1
$region0: #{tpu_custom_call.1}
  #allocation0 [shape = 'u32[]', space=smem, size = 0x4, offset = 0x4, fixed_abs, tag = 'smem constant byte address 0x4 - core index']
  #allocation1 [shape = 'u32[144,128]{1,0:T(1,128)}', space=vmem, size = 0x12000, scoped, tag = 'internal scratch']
  #allocation2 [shape = 'f32[4,1]{1,0:T(4,128)}', space=vmem, size = 0x800, scoped, tag = 'scratch operand']
  #allocation3 [shape = 'f32[4,1]{1,0:T(4,128)}', space=vmem, size = 0x800, scoped, tag = 'scratch operand']
  #allocation4 [shape = 'f32[4,1]{1,0:T(4,128)}', space=vmem, size = 0x800, scoped, tag = 'scratch operand']
  %s0 = inlined_call_operand.hbm [shape: f32[2,4,2,128], index: 0, kind: input, shape index: {}]
  %s1 = inlined_call_operand.hbm [shape: f32[2,4,2,128], index: 1, kind: input, shape index: {}]
  %s2 = inlined_call_operand.vmem [shape: f32[2,1,4,3], index: 2, kind: output, shape index: {}]
  %s3 = sld [smem:[#allocation0]]
  $region57: #{tpu_custom_call.1} parent=0
    _
  %s5 = ssub.s32 1, %s3
  %s6 = scalar_select 0, %s5, %s3
  $region1: #{tpu_custom_call.1} parent=0
    #allocation5 [shape = 'u8[8192]{0}', space=vmem, size = 0x2000, scoped, tag = 'input window, operand 0']
    #allocation6 [shape = 's32[2]{0}', space=sflag, size = 0x8, scoped, tag = 'scoped memory for tpu_custom_call.1']
    #allocation7 [shape = 'u8[8192]{0}', space=vmem, size = 0x2000, scoped, tag = 'input window, operand 1']
    #allocation8 [shape = 's32[2]{0}', space=sflag, size = 0x8, scoped, tag = 'scoped memory for tpu_custom_call.1']
    %7 = vsyncpa [#allocation6], 0
    %s8 = scalar_lea.sflag [#allocation6], 1
    %9 = vsyncpa %s8, 0
    %10 = vsyncpa [#allocation8], 0
    %s11 = scalar_lea.sflag [#allocation8], 1
    %12 = vsyncpa %s11, 0
    loop: start=0, step=1, limit=4
    $region2: #{tpu_custom_call.1} parent=1 // loop_pre_header
      _
    $region3: #{tpu_custom_call.1} parent=1 // loop_header
      %s14 = sphi 0, %s18
      %p15 = scmp.ge.s32.totalorder %s14, 4
      %s21 = sphi 0, %s40
      %s22 = sphi 0, %s36
      %s23 = sphi 0, %s32
      %s24 = sphi 0, %s21
      %s25 = sphi 0, %s22
      %s26 = sphi 0, %s23
      %s27 = sphi 0, %s24
      %s28 = sphi 0, %s25
      %s29 = sphi 0, %s26
      %s51 = sphi 0, %s53
      %s54 = sphi 0, %s51
      %s55 = sphi 0, %s54
      %s71 = sphi 0, %s55
      %s85 = sphi 0, %s87
      %s88 = sphi 0, %s85
      %s89 = sphi 0, %s88
      %s105 = sphi 0, %s89
      %s113 = sphi 0, %s115
      %s116 = sphi 0, %s113
      %s117 = sphi 0, %s116
      %s133 = sphi 0, %s117
    $region4: #{tpu_custom_call.1} parent=1 // loop_header_branch
      %17 = sbr.rel (%p15) target = $region8
    $region5: #{tpu_custom_call.1} parent=1 // loop_body
      %s19 = ssub.s32 %s14, 1
      %s20 = ssub.s32 %s14, 2
      %s30 = sadd.s32 1, %s23
      %p31 = scmp.ge.s32.totalorder %s30, 1
      %s32 = scalar_select %p31, 0, %s30
      %s33 = sadd.s32 1, %s22
      %s34 = scalar_select %p31, %s33, %s22
      %p35 = scmp.ge.s32.totalorder %s34, 1
      %s36 = scalar_select %p35, 0, %s34
      %s37 = sadd.s32 1, %s21
      %s38 = scalar_select %p35, %s37, %s21
      %p39 = scmp.ge.s32.totalorder %s38, 2
      %s40 = scalar_select %p39, 0, %s38
      %s41 = sadd.s32 %s22, %s23
      %p42 = scmp.lt.s32.totalorder %s41, 0
      %s43 = scalar_select %p42, %s41, 0
      %s44 = sadd.s32 %s36, %s32
      %p45 = scmp.lt.s32.totalorder %s44, 0
      %s46 = scalar_select %p45, %s44, 0
      %s47 = ssub.s32 %s21, %s40
      %s48 = ssub.s32 %s43, %s46
      %s49 = sor.u32 %s47, %s48
      %p50 = scmp.eq.s32.totalorder %s49, 0
      %s52 = sadd.s32 %s51, 1
      %s53 = scalar_select %p50, %s51, %s52
      %p56 = pneg %p50
      %p57 = scmp.eq.s32.totalorder %s14, 1
      %p58 = por %p56, %p57
      %p59 = scmp.ne.s32.totalorder %s51, %s54
      %p60 = scmp.eq.s32.totalorder %s14, 0
      %p61 = por %p59, %p60
      %p62 = scmp.ne.s32.totalorder %s51, %s54
      %p63 = scmp.eq.s32.totalorder %s19, 1
      %p64 = por %p62, %p63
      %p65 = scmp.ne.s32.totalorder %s54, %s55
      %p66 = scmp.eq.s32.totalorder %s19, 0
      %p67 = por %p65, %p66
      %p68 = scmp.ne.s32.totalorder %s54, %s55
      %p69 = scmp.eq.s32.totalorder %s20, 1
      %p70 = por %p68, %p69
      %p72 = scmp.ne.s32.totalorder %s55, %s71
      %p73 = scmp.eq.s32.totalorder %s20, 0
      %p74 = por %p72, %p73
      %s75 = sadd.s32 %s22, %s23
      %p76 = scmp.lt.s32.totalorder %s75, 0
      %s77 = scalar_select %p76, %s75, 0
      %s78 = sadd.s32 %s36, %s32
      %p79 = scmp.lt.s32.totalorder %s78, 0
      %s80 = scalar_select %p79, %s78, 0
      %s81 = ssub.s32 %s21, %s40
      %s82 = ssub.s32 %s77, %s80
      %s83 = sor.u32 %s81, %s82
      %p84 = scmp.eq.s32.totalorder %s83, 0
      %s86 = sadd.s32 %s85, 1
      %s87 = scalar_select %p84, %s85, %s86
      %p90 = pneg %p84
      %p91 = scmp.eq.s32.totalorder %s14, 1
      %p92 = por %p90, %p91
      %p93 = scmp.ne.s32.totalorder %s85, %s88
      %p94 = scmp.eq.s32.totalorder %s14, 0
      %p95 = por %p93, %p94
      %p96 = scmp.ne.s32.totalorder %s85, %s88
      %p97 = scmp.eq.s32.totalorder %s19, 1
      %p98 = por %p96, %p97
      %p99 = scmp.ne.s32.totalorder %s88, %s89
      %p100 = scmp.eq.s32.totalorder %s19, 0
      %p101 = por %p99, %p100
      %p102 = scmp.ne.s32.totalorder %s88, %s89
      %p103 = scmp.eq.s32.totalorder %s20, 1
      %p104 = por %p102, %p103
      %p106 = scmp.ne.s32.totalorder %s89, %s105
      %p107 = scmp.eq.s32.totalorder %s20, 0
      %p108 = por %p106, %p107
      %s109 = ssub.s32 %s21, %s40
      %s110 = ssub.s32 %s22, %s36
      %s111 = sor.u32 %s109, %s110
      %p112 = scmp.eq.s32.totalorder %s111, 0
      %s114 = sadd.s32 %s113, 1
      %s115 = scalar_select %p112, %s113, %s114
      %p118 = pneg %p112
      %p119 = scmp.eq.s32.totalorder %s14, 1
      %p120 = por %p118, %p119
      %p121 = scmp.ne.s32.totalorder %s113, %s116
      %p122 = scmp.eq.s32.totalorder %s14, 0
      %p123 = por %p121, %p122
      %p124 = scmp.ne.s32.totalorder %s113, %s116
      %p125 = scmp.eq.s32.totalorder %s19, 1
      %p126 = por %p124, %p125
      %p127 = scmp.ne.s32.totalorder %s116, %s117
      %p128 = scmp.eq.s32.totalorder %s19, 0
      %p129 = por %p127, %p128
      %p130 = scmp.ne.s32.totalorder %s116, %s117
      %p131 = scmp.eq.s32.totalorder %s20, 1
      %p132 = por %p130, %p131
      %p134 = scmp.ne.s32.totalorder %s117, %s133
      %p135 = scmp.eq.s32.totalorder %s20, 0
      %p136 = por %p134, %p135
      %p137 = scmp.le.s32.totalorder 1, %s14
      %p138 = scmp.lt.s32.totalorder %s14, 3
      %p139 = pnand %p137, %p138
      %p140 = pneg %p139
      // Predicated region
      $region9: #{tpu_custom_call.1} parent=5 // pred_check
        _
      $region10: #{tpu_custom_call.1} parent=5 // pred_check_branch
        %142 = sbr.rel (%p139) target = $region12
      $region11: #{tpu_custom_call.1} parent=5 // pred_region
        %s143 = ssub.s32 %s14, 1
      $region12: #{tpu_custom_call.1} parent=5 // pred_fallthru
        _
      %p144 = scmp.lt.s32.totalorder %s14, 2
      // Predicated region
      $region13: #{tpu_custom_call.1} parent=5 // pred_check
        %p145 = pneg %p144
      $region14: #{tpu_custom_call.1} parent=5 // pred_check_branch
        %147 = sbr.rel (%p145) target = $region16
      $region15: #{tpu_custom_call.1} parent=5 // pred_region
        // Predicated region
        $region17: #{tpu_custom_call.1} parent=15 // pred_check
          %p148 = pneg %p61
        $region18: #{tpu_custom_call.1} parent=15 // pred_check_branch
          %150 = sbr.rel (%p148) target = $region20
        $region19: #{tpu_custom_call.1} parent=15 // pred_region
          %s151 = sand.u32 %s51, 1
          %s152 = scalar_lea.sflag [#allocation6], %s151
          %s153 = sand.u32 %s51, 1
          %s154 = smul.addr %s153, 8
          %s155 = scalar_lea.vmem [#allocation5], %s154
          %s156 = sadd.s32 %s22, %s23
          %p157 = scmp.lt.s32.totalorder %s156, 0
          %s158 = scalar_select %p157, %s156, 0
          %s160 = ssub.s32 128, 128
          %161 = vsyncadd %s152, %s160
          %s162 = smul.addr %s21, 4
          %s163 = sadd.s32 %s158, %s162
          %s164 = smul.addr %s163, 32
          %s165 = scalar_lea.hbm %s0, %s164
          %s166 = sshll.u32 %s155, 4
          %s167 = int_to_ptr.vmem [resolvable:$true] %s166
          %172 = dma.hbm_to_vmem [thread:$0]  %s165, 128, %s167, %s152, 32, 32, 2
        $region20: #{tpu_custom_call.1} parent=15 // pred_fallthru
          _
        // Predicated region
        $region21: #{tpu_custom_call.1} parent=15 // pred_check
          %p173 = pneg %p95
        $region22: #{tpu_custom_call.1} parent=15 // pred_check_branch
          %175 = sbr.rel (%p173) target = $region24
        $region23: #{tpu_custom_call.1} parent=15 // pred_region
          %s176 = sand.u32 %s85, 1
          %s177 = scalar_lea.sflag [#allocation8], %s176
          %s178 = sand.u32 %s85, 1
          %s179 = smul.addr %s178, 8
          %s180 = scalar_lea.vmem [#allocation7], %s179
          %s181 = sadd.s32 %s22, %s23
          %p182 = scmp.lt.s32.totalorder %s181, 0
          %s183 = scalar_select %p182, %s181, 0
          %s185 = ssub.s32 128, 128
          %186 = vsyncadd %s177, %s185
          %s187 = smul.addr %s21, 4
          %s188 = sadd.s32 %s183, %s187
          %s189 = smul.addr %s188, 32
          %s190 = scalar_lea.hbm %s1, %s189
          %s191 = sshll.u32 %s180, 4
          %s192 = int_to_ptr.vmem [resolvable:$true] %s191
          %197 = dma.hbm_to_vmem [thread:$0]  %s190, 128, %s192, %s177, 32, 32, 2
        $region24: #{tpu_custom_call.1} parent=15 // pred_fallthru
          _
      $region16: #{tpu_custom_call.1} parent=5 // pred_fallthru
        _
      %p198 = scmp.le.s32.totalorder 1, %s14
      %p199 = scmp.lt.s32.totalorder %s14, 3
      %p200 = pnand %p198, %p199
      %p201 = pneg %p200
      // Predicated region
      $region25: #{tpu_custom_call.1} parent=5 // pred_check
        _
      $region26: #{tpu_custom_call.1} parent=5 // pred_check_branch
        %203 = sbr.rel (%p200) target = $region28
      $region27: #{tpu_custom_call.1} parent=5 // pred_region
        %s204 = ssub.s32 %s14, 1
        %s205 = sand.u32 %s54, 1
        %s206 = scalar_lea.sflag [#allocation6], %s205
        %s207 = sand.u32 %s54, 1
        %s208 = smul.addr %s207, 8
        %s209 = scalar_lea.vmem [#allocation5], %s208
        // Predicated region
        $region29: #{tpu_custom_call.1} parent=27 // pred_check
          %p210 = pneg %p67
        $region30: #{tpu_custom_call.1} parent=27 // pred_check_branch
          %212 = sbr.rel (%p210) target = $region32
        $region31: #{tpu_custom_call.1} parent=27 // pred_region
          %213 = dma.done %s206, 128
        $region32: #{tpu_custom_call.1} parent=27 // pred_fallthru
          _
        %s214 = sand.u32 %s88, 1
        %s215 = scalar_lea.sflag [#allocation8], %s214
        %s216 = sand.u32 %s88, 1
        %s217 = smul.addr %s216, 8
        %s218 = scalar_lea.vmem [#allocation7], %s217
        // Predicated region
        $region33: #{tpu_custom_call.1} parent=27 // pred_check
          %p219 = pneg %p101
        $region34: #{tpu_custom_call.1} parent=27 // pred_check_branch
          %221 = sbr.rel (%p219) target = $region36
        $region35: #{tpu_custom_call.1} parent=27 // pred_region
          %222 = dma.done %s215, 128
        $region36: #{tpu_custom_call.1} parent=27 // pred_fallthru
          _
        %s223 = sand.u32 %s54, 1
        %s224 = scalar_lea.sflag [#allocation6], %s223
        %s225 = sand.u32 %s54, 1
        %s226 = smul.addr %s225, 8
        %s227 = scalar_lea.vmem [#allocation5], %s226
        %p228 = pneg %p67
        %p229 = pneg %p64
        %s230 = sand.u32 %s88, 1
        %s231 = scalar_lea.sflag [#allocation8], %s230
        %s232 = sand.u32 %s88, 1
        %s233 = smul.addr %s232, 8
        %s234 = scalar_lea.vmem [#allocation7], %s233
        %p235 = pneg %p101
        %p236 = pneg %p98
        %p237 = pneg %p129
        %p238 = pneg %p126
        %p239 = scmp.lt.s32.totalorder %s24, 1
        %s240 = scalar_select %p239, %s24, 1
        %p241 = scmp.lt.s32.totalorder %s25, 0
        %s242 = scalar_select %p241, %s25, 0
        %s243 = sadd.s32 %s242, %s240
        %s244 = smul.addr %s243, 4
        %s245 = scalar_lea.vmem %s2, %s244
        %s246 = sadd.s32 %s25, %s26
        %p247 = scmp.lt.s32.totalorder %s246, 0
        %s248 = scalar_select %p247, %s246, 0
        %s249 = sadd.s32 %s25, %s26
        %p250 = scmp.lt.s32.totalorder %s249, 0
        %s251 = scalar_select %p250, %s249, 0
        %p252 = scmp.lt.s32.totalorder %s24, 1
        %s253 = scalar_select %p252, %s24, 1
        %p254 = scmp.lt.s32.totalorder %s25, 0
        %s255 = scalar_select %p254, %s25, 0
        %s256 = sadd.s32 %s255, %s253
        %s257 = smul.addr %s256, 4
        %s258 = scalar_lea.vmem %s2, %s257
        %p259 = scmp.eq.s32.totalorder %s26, 0
        // Predicated region
        $region37: #{tpu_custom_call.1} parent=27 // pred_check
          %p260 = pneg %p259
        $region38: #{tpu_custom_call.1} parent=27 // pred_check_branch
          %262 = sbr.rel (%p260) target = $region40
        $region39: #{tpu_custom_call.1} parent=27 // pred_region
          %vm263 = vcmask 3072
          %264 = vst.msk [vmem:[#allocation2] sm:$0xf] %vm263, 0.0
          %265 = vst.msk [vmem:[#allocation3] sm:$0xf] %vm263, 0.0
          %266 = vst.msk [vmem:[#allocation4] sm:$0xf] %vm263, 0.0
        $region40: #{tpu_custom_call.1} parent=27 // pred_fallthru
          _
        %v267 = vld [vmem:[%s209] sm:$0x3]
        %v268 = vld [vmem:[%s209 + $0x2] sm:$0x3]
        %v269 = vld [vmem:[%s209 + $0x4] sm:$0x3]
        %v270 = vld [vmem:[%s209 + $0x6] sm:$0x3]
        %v271 = vld [vmem:[%s218] sm:$0x3]
        %v272 = vld [vmem:[%s218 + $0x2] sm:$0x3]
        %v273 = vld [vmem:[%s218 + $0x4] sm:$0x3]
        %v274 = vld [vmem:[%s218 + $0x6] sm:$0x3]
        %v275 = vxor.u32 %v267, 2147483648
        %v276 = vxor.u32 %v268, 2147483648
        %v277 = vxor.u32 %v269, 2147483648
        %v278 = vxor.u32 %v270, 2147483648
        %v279 = vmul.f32 %v275, 1.442695
        %v280 = vpow.pop %v279
        %v281 = vmul.f32 %v276, 1.442695
        %v282 = vpow.pop %v281
        %v283 = vmul.f32 %v277, 1.442695
        %v284 = vpow.pop %v283
        %v285 = vmul.f32 %v278, 1.442695
        %v286 = vpow.pop %v285
        %v287 = vadd.f32 %v280, 1.0
        %v288 = vadd.f32 %v282, 1.0
        %v289 = vadd.f32 %v284, 1.0
        %v290 = vadd.f32 %v286, 1.0
        %v291 = vrcp.pop %v287
        %v292 = vmul.f32 1.0, %v291
        %v293 = vrcp.pop %v288
        %v294 = vmul.f32 1.0, %v293
        %v295 = vrcp.pop %v289
        %v296 = vmul.f32 1.0, %v295
        %v297 = vrcp.pop %v290
        %v298 = vmul.f32 1.0, %v297
        %v299 = vld [vmem:[#allocation2] sm:$0xf]
        %v300 = vmul.f32 %v292, %v271
        %v301 = vmul.f32 %v294, %v272
        %v302 = vmul.f32 %v296, %v273
        %v303 = vmul.f32 %v298, %v274
        %vm304 = vcmask 1041408
        %v305 = vsel %vm304, %v300, 0.0
        %306 = vadd.xlane.f32.xlu0 %v305
        %v307 = vpop.xlane.xlu0 %306
        %v308 = vsel %vm304, %v301, 0.0
        %309 = vadd.xlane.f32.xlu0 %v308
        %v310 = vpop.xlane.xlu0 %309
        %v311 = vsel %vm304, %v302, 0.0
        %312 = vadd.xlane.f32.xlu0 %v311
        %v313 = vpop.xlane.xlu0 %312
        %v314 = vsel %vm304, %v303, 0.0
        %315 = vadd.xlane.f32.xlu0 %v314
        %v316 = vpop.xlane.xlu0 %315
        %v321 = vlaneseq
        %v322 = vand.u32 %v321, 127
        %v323 = vlaneseq
        %v324 = vshrl.u32 %v323, 7
        %v325 = vsub.s32 %v322, %v324
        %v326 = vrot.slane %v307, %v325
        %v327 = vlaneseq
        %v328 = vshrl.u32 %v327, 7
        %v329 = vsub.s32 %v322, %v328
        %v330 = vrot.slane %v310, %v329
        %v331 = vlaneseq
        %v332 = vshrl.u32 %v331, 7
        %v333 = vsub.s32 %v322, %v332
        %v334 = vrot.slane %v313, %v333
        %v335 = vlaneseq
        %v336 = vshrl.u32 %v335, 7
        %v337 = vsub.s32 %v322, %v336
        %v338 = vrot.slane %v316, %v337
        %vm339 = vcmask 1041409
        %v340 = vsel %vm339, %v330, %v326
        %vm341 = vcmask 1042434
        %v342 = vsel %vm341, %v334, %v340
        %vm343 = vcmask 1043459
        %v344 = vsel %vm343, %v338, %v342
        %vm346 = vcmask 11264
        %v347 = vsel %vm346, %v344, 0.0
        %348 = vadd.xlane.f32.xlu0 %v347
        %v349 = vpop.xlane.xlu0 %348
        %v350 = vadd.f32 %v299, %v349
        %vm351 = vcmask 3072
        %352 = vst.msk [vmem:[#allocation2] sm:$0xf] %vm351, %v350
        %v353 = vld [vmem:[#allocation3] sm:$0xf]
        %v354 = vmul.f32 %v292, %v292
        %v355 = vmul.f32 %v294, %v294
        %v356 = vmul.f32 %v296, %v296
        %v357 = vmul.f32 %v298, %v298
        %v358 = vsel %vm304, %v354, 0.0
        %359 = vadd.xlane.f32.xlu0 %v358
        %v360 = vpop.xlane.xlu0 %359
        %v361 = vsel %vm304, %v355, 0.0
        %362 = vadd.xlane.f32.xlu0 %v361
        %v363 = vpop.xlane.xlu0 %362
        %v364 = vsel %vm304, %v356, 0.0
        %365 = vadd.xlane.f32.xlu0 %v364
        %v366 = vpop.xlane.xlu0 %365
        %v367 = vsel %vm304, %v357, 0.0
        %368 = vadd.xlane.f32.xlu0 %v367
        %v369 = vpop.xlane.xlu0 %368
        %v374 = vlaneseq
        %v375 = vshrl.u32 %v374, 7
        %v376 = vsub.s32 %v322, %v375
        %v377 = vrot.slane %v360, %v376
        %v378 = vlaneseq
        %v379 = vshrl.u32 %v378, 7
        %v380 = vsub.s32 %v322, %v379
        %v381 = vrot.slane %v363, %v380
        %v382 = vlaneseq
        %v383 = vshrl.u32 %v382, 7
        %v384 = vsub.s32 %v322, %v383
        %v385 = vrot.slane %v366, %v384
        %v386 = vlaneseq
        %v387 = vshrl.u32 %v386, 7
        %v388 = vsub.s32 %v322, %v387
        %v389 = vrot.slane %v369, %v388
        %v390 = vsel %vm339, %v381, %v377
        %v391 = vsel %vm341, %v385, %v390
        %v392 = vsel %vm343, %v389, %v391
        %v394 = vsel %vm346, %v392, 0.0
        %395 = vadd.xlane.f32.xlu0 %v394
        %v396 = vpop.xlane.xlu0 %395
        %v397 = vadd.f32 %v353, %v396
        %398 = vst.msk [vmem:[#allocation3] sm:$0xf] %vm351, %v397
        %v399 = vld [vmem:[#allocation4] sm:$0xf]
        %v400 = vmul.f32 %v271, %v271
        %v401 = vmul.f32 %v272, %v272
        %v402 = vmul.f32 %v273, %v273
        %v403 = vmul.f32 %v274, %v274
        %v404 = vsel %vm304, %v400, 0.0
        %405 = vadd.xlane.f32.xlu0 %v404
        %v406 = vpop.xlane.xlu0 %405
        %v407 = vsel %vm304, %v401, 0.0
        %408 = vadd.xlane.f32.xlu0 %v407
        %v409 = vpop.xlane.xlu0 %408
        %v410 = vsel %vm304, %v402, 0.0
        %411 = vadd.xlane.f32.xlu0 %v410
        %v412 = vpop.xlane.xlu0 %411
        %v413 = vsel %vm304, %v403, 0.0
        %414 = vadd.xlane.f32.xlu0 %v413
        %v415 = vpop.xlane.xlu0 %414
        %v420 = vlaneseq
        %v421 = vshrl.u32 %v420, 7
        %v422 = vsub.s32 %v322, %v421
        %v423 = vrot.slane %v406, %v422
        %v424 = vlaneseq
        %v425 = vshrl.u32 %v424, 7
        %v426 = vsub.s32 %v322, %v425
        %v427 = vrot.slane %v409, %v426
        %v428 = vlaneseq
        %v429 = vshrl.u32 %v428, 7
        %v430 = vsub.s32 %v322, %v429
        %v431 = vrot.slane %v412, %v430
        %v432 = vlaneseq
        %v433 = vshrl.u32 %v432, 7
        %v434 = vsub.s32 %v322, %v433
        %v435 = vrot.slane %v415, %v434
        %v436 = vsel %vm339, %v427, %v423
        %v437 = vsel %vm341, %v431, %v436
        %v438 = vsel %vm343, %v435, %v437
        %v440 = vsel %vm346, %v438, 0.0
        %441 = vadd.xlane.f32.xlu0 %v440
        %v442 = vpop.xlane.xlu0 %441
        %v443 = vadd.f32 %v399, %v442
        %444 = vst.msk [vmem:[#allocation4] sm:$0xf] %vm351, %v443
        // Predicated region
        $region41: #{tpu_custom_call.1} parent=27 // pred_check
          %p445 = pneg %p259
        $region42: #{tpu_custom_call.1} parent=27 // pred_check_branch
          %447 = sbr.rel (%p445) target = $region44
        $region43: #{tpu_custom_call.1} parent=27 // pred_region
          %v448 = vld [vmem:[#allocation2] sm:$0xf]
          %v449 = vld [vmem:[#allocation3] sm:$0xf]
          %v450 = vld [vmem:[#allocation4] sm:$0xf]
          %452 = vrot.lane.b32.xlu0 %v449, 1
          %v453 = vpop.permute.xlu0 %452
          %456 = vrot.lane.b32.xlu0 %v450, 2
          %v457 = vpop.permute.xlu0 %456
          %vm459 = vcmask 7168
          %v460 = vsel %vm459, %v448, %v453
          %vm461 = vcmask 15360
          %v462 = vsel %vm461, %v460, %v457
          %vm463 = vcmask 19456
          %464 = vst.msk [vmem:[%s258] sm:$0xf] %vm463, %v462
        $region44: #{tpu_custom_call.1} parent=27 // pred_fallthru
          _
        %p465 = scmp.lt.s32.totalorder %s24, 1
        %s466 = scalar_select %p465, %s24, 1
        %p467 = scmp.lt.s32.totalorder %s25, 0
        %s468 = scalar_select %p467, %s25, 0
        %s469 = sadd.s32 %s468, %s466
        %s470 = smul.addr %s469, 4
        %s471 = scalar_lea.vmem %s2, %s470
        // Predicated region
        $region45: #{tpu_custom_call.1} parent=27 // pred_check
          %p472 = pneg %p126
        $region46: #{tpu_custom_call.1} parent=27 // pred_check_branch
          %474 = sbr.rel (%p472) target = $region48
        $region47: #{tpu_custom_call.1} parent=27 // pred_region
          _
        $region48: #{tpu_custom_call.1} parent=27 // pred_fallthru
          _
      $region28: #{tpu_custom_call.1} parent=5 // pred_fallthru
        _
      %p475 = scmp.le.s32.totalorder 2, %s14
      // Predicated region
      $region49: #{tpu_custom_call.1} parent=5 // pred_check
        %p476 = pneg %p475
      $region50: #{tpu_custom_call.1} parent=5 // pred_check_branch
        %478 = sbr.rel (%p476) target = $region52
      $region51: #{tpu_custom_call.1} parent=5 // pred_region
        %s479 = ssub.s32 %s14, 2
        // Predicated region
        $region53: #{tpu_custom_call.1} parent=51 // pred_check
          %p480 = pneg %p132
        $region54: #{tpu_custom_call.1} parent=51 // pred_check_branch
          %482 = sbr.rel (%p480) target = $region56
        $region55: #{tpu_custom_call.1} parent=51 // pred_region
          %p483 = scmp.lt.s32.totalorder %s27, 1
          %s484 = scalar_select %p483, %s27, 1
          %p485 = scmp.lt.s32.totalorder %s28, 0
          %s486 = scalar_select %p485, %s28, 0
          %s487 = sadd.s32 %s486, %s484
          %s488 = smul.addr %s487, 4
          %s489 = scalar_lea.vmem %s2, %s488
        $region56: #{tpu_custom_call.1} parent=51 // pred_fallthru
          _
      $region52: #{tpu_custom_call.1} parent=5 // pred_fallthru
        _
    $region6: #{tpu_custom_call.1} parent=1 // loop_footer
      %s18 = sadd.s32 1, %s14
    $region7: #{tpu_custom_call.1} parent=1 // loop_footer_branch
      %13 = sbr.rel target = $region3
    $region8: #{tpu_custom_call.1} parent=1 // loop_exit
      _
    %490 = vsyncpa [#allocation6], 1
    %s491 = scalar_lea.sflag [#allocation6], 1
    %492 = vsyncpa %s491, 1
    %493 = vsyncpa [#allocation8], 1
    %s494 = scalar_lea.sflag [#allocation8], 1
    %495 = vsyncpa %s494, 1

</llo_original>
